<compile_context>
chip_gen: v7x
topology: tpu7x:2x2x1
jax: 0.10.0
libtpu: 0.0.40
codegen_flags: <defaults>
</compile_context>

<pallas_src>
import functools

import jax
import jax.numpy as jnp
import numpy as np
from jax.experimental import pallas as pl
from jax.experimental.pallas import tpu as pltpu


def _round_up(n: int, m: int) -> int:
    return ((n + m - 1) // m) * m


def mlp_kernel(x_ref, w1_ref, b1_ref, w2_ref, b2_ref, w3_ref, o_ref):
    # One batch tile per grid step; all weights are VMEM-resident (constant index_map).
    x = x_ref[...]                                                        # (TB, D) bf16
    h1 = jnp.dot(x, w1_ref[...], preferred_element_type=jnp.float32)      # MXU, f32 acc
    h1 = jnp.maximum(h1 + b1_ref[...], 0.0)                               # BN1 shift + ReLU (f32)
    h2 = jnp.dot(h1.astype(jnp.bfloat16), w2_ref[...],
                 preferred_element_type=jnp.float32)                      # (TB, 32) f32
    h2 = jnp.maximum(h2 + b2_ref[...], 0.0)                               # BN2 shift + ReLU (f32)
    # fc3 (32 -> 1) as a VPU multiply + XLU lane-reduce (free slots vs. a 1-lane MXU matmul).
    o_ref[...] = jnp.sum(h2 * w3_ref[...], axis=-1, keepdims=True)        # (TB, 1) f32


@functools.partial(jax.jit, static_argnames=("block_b",))
def net_forward(x, params, *, block_b: int = 512):
    """x: (B, input_size) float32.  params: dict from make_params (BN pre-folded)."""
    B, D = x.shape
    TB = min(block_b, _round_up(B, 128))       # batch tile: multiple of 128, capped at 512
    B_pad = _round_up(B, TB)

    xb = x.astype(jnp.bfloat16)                # halve the dominant HBM byte stream
    if B_pad != B:
        xb = jnp.pad(xb, ((0, B_pad - B), (0, 0)))

    w1, b1 = params["w1"], params["b1"]
    w2, b2 = params["w2"], params["b2"]
    w3 = params["w3"]

    cost = pl.CostEstimate(
        flops=2 * B_pad * (D * 64 + 64 * 32 + 32),
        transcendentals=0,
        bytes_accessed=(B_pad * D * 2 + B_pad * 4          # x in (bf16), out (f32)
                        + w1.size * 2 + w2.size * 2        # bf16 weights
                        + (b1.size + b2.size + w3.size) * 4),
    )

    out = pl.pallas_call(
        mlp_kernel,
        out_shape=jax.ShapeDtypeStruct((B_pad, 1), jnp.float32),
        grid=(B_pad // TB,),
        in_specs=[
            pl.BlockSpec((TB, D), lambda i: (i, 0)),        # x: tiled over batch
            pl.BlockSpec((D, 64), lambda i: (0, 0)),        # w1 (BN1 scale folded in)
            pl.BlockSpec((1, 64), lambda i: (0, 0)),        # BN1 shift
            pl.BlockSpec((64, 32), lambda i: (0, 0)),       # w2 (BN2 scale folded in)
            pl.BlockSpec((1, 32), lambda i: (0, 0)),        # BN2 shift
            pl.BlockSpec((1, 32), lambda i: (0, 0)),        # fc3 weight row
        ],
        out_specs=pl.BlockSpec((TB, 1), lambda i: (i, 0)),
        compiler_params=pltpu.CompilerParams(
            dimension_semantics=("parallel",)),             # batch axis -> megacore shard
        cost_estimate=cost,
    )(xb, w1, b1, w2, b2, w3)

    return out[:B]


def make_params(key, input_size: int, eps: float = 1e-5):
    """Parameters matching the nn.Module shapes, with BatchNorm folded in.

    fc1.weight (64, input_size)  -> stored transposed (input_size, 64), scaled by BN1
    fc2.weight (32, 64)          -> stored transposed (64, 32), scaled by BN2
    fc3.weight (1, 32)           -> kept as a (1, 32) row for the in-kernel reduction
    """
    k1, k2, k3, k4, k5, k6, k7 = jax.random.split(key, 7)

    def uniform_init(k, fan_in, shape):
        bound = 1.0 / np.sqrt(fan_in)
        return jax.random.uniform(k, shape, jnp.float32, -bound, bound)

    w1 = uniform_init(k1, input_size, (input_size, 64))     # fc1.weight.T
    w2 = uniform_init(k2, 64, (64, 32))                      # fc2.weight.T
    w3 = uniform_init(k3, 32, (1, 32))                       # fc3.weight

    # BatchNorm params (distinct keys for gamma/beta); running stats at init values (0, 1).
    g1 = 1.0 + 0.1 * jax.random.normal(k4, (64,), jnp.float32)
    be1 = 0.1 * jax.random.normal(k5, (64,), jnp.float32)
    g2 = 1.0 + 0.1 * jax.random.normal(k6, (32,), jnp.float32)
    be2 = 0.1 * jax.random.normal(k7, (32,), jnp.float32)
    rm1, rv1 = jnp.zeros((64,), jnp.float32), jnp.ones((64,), jnp.float32)
    rm2, rv2 = jnp.zeros((32,), jnp.float32), jnp.ones((32,), jnp.float32)

    s1 = g1 / jnp.sqrt(rv1 + eps)
    s2 = g2 / jnp.sqrt(rv2 + eps)

    return {
        # BN scale folded into the weights (removes one VPU mul per activation element).
        "w1": (w1 * s1[None, :]).astype(jnp.bfloat16),
        "b1": (be1 - rm1 * s1).reshape(1, 64).astype(jnp.float32),
        "w2": (w2 * s2[None, :]).astype(jnp.bfloat16),
        "b2": (be2 - rm2 * s2).reshape(1, 32).astype(jnp.float32),
        "w3": w3.astype(jnp.float32),
    }


def net_reference(x, p):
    """Pure-JAX reference with the same dtype policy as the kernel."""
    xb = x.astype(jnp.bfloat16)
    h1 = jnp.maximum(jnp.dot(xb, p["w1"], preferred_element_type=jnp.float32) + p["b1"], 0.0)
    h2 = jnp.maximum(jnp.dot(h1.astype(jnp.bfloat16), p["w2"],
                             preferred_element_type=jnp.float32) + p["b2"], 0.0)
    return jnp.sum(h2 * p["w3"], axis=-1, keepdims=True)


if __name__ == "__main__":
    key = jax.random.PRNGKey(0)
    kx, kp, kx2 = jax.random.split(key, 3)

    input_size = 32
    params = make_params(kp, input_size)

    # Small case (batch < one tile: padded to 128, single grid step).
    x_small = jax.random.normal(kx, (8, input_size), jnp.float32)
    out_small = jax.block_until_ready(net_forward(x_small, params))
    np.testing.assert_allclose(np.asarray(out_small),
                               np.asarray(net_reference(x_small, params)),
                               rtol=2e-2, atol=2e-2)

    # Larger case that exercises the batch grid / pipelining (TB=512, grid=(2,)).
    x_big = jax.random.normal(kx2, (1024, input_size), jnp.float32)
    out_big = jax.block_until_ready(net_forward(x_big, params))
    np.testing.assert_allclose(np.asarray(out_big),
                               np.asarray(net_reference(x_big, params)),
                               rtol=2e-2, atol=2e-2)

    print("KERNEL_OK")
</pallas_src>

<mosaic_0001>
module attributes {stable_mosaic.version = 11 : i64} {
  func.func @mlp_kernel(%arg0: i32, %arg1: memref<128x32xbf16, #tpu.memory_space<vmem>>, %arg2: memref<32x64xbf16, #tpu.memory_space<vmem>>, %arg3: memref<1x64xf32, #tpu.memory_space<vmem>>, %arg4: memref<64x32xbf16, #tpu.memory_space<vmem>>, %arg5: memref<1x32xf32, #tpu.memory_space<vmem>>, %arg6: memref<1x32xf32, #tpu.memory_space<vmem>>, %arg7: memref<128x1xf32, #tpu.memory_space<vmem>>) attributes {dimension_semantics = [#tpu.dimension_semantics<parallel>], iteration_bounds = array<i64: 1>, scalar_prefetch = 0 : i64, scratch_operands = 0 : i64, tpu.core_type = #tpu.core_type<tc>, window_params = [{transform_indices = @transform_0, window_bounds = array<i64: 128, 32>}, {pipeline_mode = #tpu.pipeline_mode<synchronous>, transform_indices = @transform_1, window_bounds = array<i64: 32, 64>}, {pipeline_mode = #tpu.pipeline_mode<synchronous>, transform_indices = @transform_2, window_bounds = array<i64: 1, 64>}, {pipeline_mode = #tpu.pipeline_mode<synchronous>, transform_indices = @transform_3, window_bounds = array<i64: 64, 32>}, {pipeline_mode = #tpu.pipeline_mode<synchronous>, transform_indices = @transform_4, window_bounds = array<i64: 1, 32>}, {pipeline_mode = #tpu.pipeline_mode<synchronous>, transform_indices = @transform_5, window_bounds = array<i64: 1, 32>}, {transform_indices = @transform_6, window_bounds = array<i64: 128, 1>}]} {
    %c0 = arith.constant 0 : index
    %c0_0 = arith.constant 0 : index
    %0 = vector.load %arg1[%c0, %c0_0] : memref<128x32xbf16, #tpu.memory_space<vmem>>, vector<128x32xbf16>
    %c0_1 = arith.constant 0 : index
    %c0_2 = arith.constant 0 : index
    %1 = vector.load %arg2[%c0_1, %c0_2] : memref<32x64xbf16, #tpu.memory_space<vmem>>, vector<32x64xbf16>
    %cst = arith.constant dense<0.000000e+00> : vector<128x64xf32>
    %2 = tpu.matmul %0, %1, %cst {dimension_numbers = #tpu.dot_dimension_numbers<[1], [0], [0], [1], [0, 0, 1, 1], [], []>} : vector<128x32xbf16>, vector<32x64xbf16>, vector<128x64xf32> -> vector<128x64xf32>
    %c0_3 = arith.constant 0 : index
    %c0_4 = arith.constant 0 : index
    %3 = vector.load %arg3[%c0_3, %c0_4] : memref<1x64xf32, #tpu.memory_space<vmem>>, vector<1x64xf32>
    %4 = vector.broadcast %3 : vector<1x64xf32> to vector<128x64xf32>
    %5 = arith.addf %2, %4 : vector<128x64xf32>
    %cst_5 = arith.constant 0.000000e+00 : f32
    %6 = vector.broadcast %cst_5 : f32 to vector<128x64xf32>
    %7 = arith.maximumf %5, %6 : vector<128x64xf32>
    %8 = arith.truncf %7 : vector<128x64xf32> to vector<128x64xbf16>
    %c0_6 = arith.constant 0 : index
    %c0_7 = arith.constant 0 : index
    %9 = vector.load %arg4[%c0_6, %c0_7] : memref<64x32xbf16, #tpu.memory_space<vmem>>, vector<64x32xbf16>
    %cst_8 = arith.constant dense<0.000000e+00> : vector<128x32xf32>
    %10 = tpu.matmul %8, %9, %cst_8 {dimension_numbers = #tpu.dot_dimension_numbers<[1], [0], [0], [1], [0, 0, 1, 1], [], []>} : vector<128x64xbf16>, vector<64x32xbf16>, vector<128x32xf32> -> vector<128x32xf32>
    %c0_9 = arith.constant 0 : index
    %c0_10 = arith.constant 0 : index
    %11 = vector.load %arg5[%c0_9, %c0_10] : memref<1x32xf32, #tpu.memory_space<vmem>>, vector<1x32xf32>
    %12 = vector.broadcast %11 : vector<1x32xf32> to vector<128x32xf32>
    %13 = arith.addf %10, %12 : vector<128x32xf32>
    %cst_11 = arith.constant 0.000000e+00 : f32
    %14 = vector.broadcast %cst_11 : f32 to vector<128x32xf32>
    %15 = arith.maximumf %13, %14 : vector<128x32xf32>
    %c0_12 = arith.constant 0 : index
    %c0_13 = arith.constant 0 : index
    %16 = vector.load %arg6[%c0_12, %c0_13] : memref<1x32xf32, #tpu.memory_space<vmem>>, vector<1x32xf32>
    %17 = vector.broadcast %16 : vector<1x32xf32> to vector<128x32xf32>
    %18 = arith.mulf %15, %17 : vector<128x32xf32>
    %cst_14 = arith.constant dense<0.000000e+00> : vector<128xf32>
    %19 = vector.multi_reduction <add>, %18, %cst_14 [1] : vector<128x32xf32> to vector<128xf32>
    %20 = vector.shape_cast %19 : vector<128xf32> to vector<128x1xf32>
    %c0_15 = arith.constant 0 : index
    %c0_16 = arith.constant 0 : index
    %21 = vector.load %arg7[%c0_15, %c0_16] : memref<128x1xf32, #tpu.memory_space<vmem>>, vector<128x1xf32>
    tpu.vector_store %arg7[%c0_15, %c0_16], %20 {strides = array<i32>} : memref<128x1xf32, #tpu.memory_space<vmem>>, vector<128x1xf32>,
    return
  }
  func.func @transform_0(%arg0: i32) -> (i32, i32) {
    %c0_i32 = arith.constant 0 : i32
    %c0_i32_0 = arith.constant 0 : i32
    return %arg0, %c0_i32 : i32, i32
  }
  func.func @transform_1(%arg0: i32) -> (i32, i32) {
    %c0_i32 = arith.constant 0 : i32
    %c0_i32_0 = arith.constant 0 : i32
    %c0_i32_1 = arith.constant 0 : i32
    return %c0_i32, %c0_i32_0 : i32, i32
  }
  func.func @transform_2(%arg0: i32) -> (i32, i32) {
    %c0_i32 = arith.constant 0 : i32
    %c0_i32_0 = arith.constant 0 : i32
    %c0_i32_1 = arith.constant 0 : i32
    return %c0_i32, %c0_i32_0 : i32, i32
  }
  func.func @transform_3(%arg0: i32) -> (i32, i32) {
    %c0_i32 = arith.constant 0 : i32
    %c0_i32_0 = arith.constant 0 : i32
    %c0_i32_1 = arith.constant 0 : i32
    return %c0_i32, %c0_i32_0 : i32, i32
  }
  func.func @transform_4(%arg0: i32) -> (i32, i32) {
    %c0_i32 = arith.constant 0 : i32
    %c0_i32_0 = arith.constant 0 : i32
    %c0_i32_1 = arith.constant 0 : i32
    return %c0_i32, %c0_i32_0 : i32, i32
  }
  func.func @transform_5(%arg0: i32) -> (i32, i32) {
    %c0_i32 = arith.constant 0 : i32
    %c0_i32_0 = arith.constant 0 : i32
    %c0_i32_1 = arith.constant 0 : i32
    return %c0_i32, %c0_i32_0 : i32, i32
  }
  func.func @transform_6(%arg0: i32) -> (i32, i32) {
    %c0_i32 = arith.constant 0 : i32
    %c0_i32_0 = arith.constant 0 : i32
    return %arg0, %c0_i32 : i32, i32
  }
}

</mosaic_0001>

<llo_original>
// kernel: net_forward.1
$region0: #{net_forward.1}
  #allocation0 [shape = 'u32[]', space=smem, size = 0x4, offset = 0x4, fixed_abs, tag = 'smem constant byte address 0x4 - core index']
  #allocation1 [shape = 'u32[144,128]{1,0:T(1,128)}', space=vmem, size = 0x12000, scoped, tag = 'internal scratch']
  %s0 = inlined_call_operand.vmem [shape: bf16[128,32], index: 0, kind: input, shape index: {}]
  %s1 = inlined_call_operand.vmem [shape: bf16[32,64], index: 1, kind: input, shape index: {}]
  %s2 = inlined_call_operand.vmem [shape: f32[1,64], index: 2, kind: input, shape index: {}]
  %s3 = inlined_call_operand.vmem [shape: bf16[64,32], index: 3, kind: input, shape index: {}]
  %s4 = inlined_call_operand.vmem [shape: f32[1,32], index: 4, kind: input, shape index: {}]
  %s5 = inlined_call_operand.vmem [shape: f32[1,32], index: 5, kind: input, shape index: {}]
  %s6 = inlined_call_operand.vmem [shape: f32[128,1], index: 6, kind: output, shape index: {}]
  %s7 = sld [smem:[#allocation0]]
  $region34: #{net_forward.1} parent=0
    _
  %s9 = ssub.s32 1, %s7
  %s10 = scalar_select 0, %s9, %s7
  // Predicated region
  $region2: #{net_forward.1} parent=0 // pred_check
    _
  $region3: #{net_forward.1} parent=0 // pred_check_branch
    %12 = sbr.rel (0) target = $region5
  $region4: #{net_forward.1} parent=0 // pred_region
    _
  $region5: #{net_forward.1} parent=0 // pred_fallthru
    _
  // Predicated region
  $region6: #{net_forward.1} parent=0 // pred_check
    _
  $region7: #{net_forward.1} parent=0 // pred_check_branch
    %14 = sbr.rel (0) target = $region9
  $region8: #{net_forward.1} parent=0 // pred_region
    _
  $region9: #{net_forward.1} parent=0 // pred_fallthru
    _
  // Predicated region
  $region10: #{net_forward.1} parent=0 // pred_check
    _
  $region11: #{net_forward.1} parent=0 // pred_check_branch
    %16 = sbr.rel (0) target = $region13
  $region12: #{net_forward.1} parent=0 // pred_region
    _
  $region13: #{net_forward.1} parent=0 // pred_fallthru
    _
  // Predicated region
  $region14: #{net_forward.1} parent=0 // pred_check
    _
  $region15: #{net_forward.1} parent=0 // pred_check_branch
    %18 = sbr.rel (0) target = $region17
  $region16: #{net_forward.1} parent=0 // pred_region
    _
  $region17: #{net_forward.1} parent=0 // pred_fallthru
    _
  // Predicated region
  $region18: #{net_forward.1} parent=0 // pred_check
    _
  $region19: #{net_forward.1} parent=0 // pred_check_branch
    %20 = sbr.rel (0) target = $region21
  $region20: #{net_forward.1} parent=0 // pred_region
    _
  $region21: #{net_forward.1} parent=0 // pred_fallthru
    _
  // Predicated region
  $region22: #{net_forward.1} parent=0 // pred_check
    _
  $region23: #{net_forward.1} parent=0 // pred_check_branch
    %22 = sbr.rel (0) target = $region25
  $region24: #{net_forward.1} parent=0 // pred_region
    _
  $region25: #{net_forward.1} parent=0 // pred_fallthru
    _
  %v24 = vld [vmem:[%s0] sm:$0xf]
  %v25 = vld [vmem:[%s0 + $0x4] sm:$0xf]
  %v26 = vld [vmem:[%s0 + $0x8] sm:$0xf]
  %v27 = vld [vmem:[%s0 + $0xc] sm:$0xf]
  %v28 = vld [vmem:[%s0 + $0x10] sm:$0xf]
  %v29 = vld [vmem:[%s0 + $0x14] sm:$0xf]
  %v30 = vld [vmem:[%s0 + $0x18] sm:$0xf]
  %v31 = vld [vmem:[%s0 + $0x1c] sm:$0xf]
  %v32 = vld [vmem:[%s0 + $0x20] sm:$0xf]
  %v33 = vld [vmem:[%s0 + $0x24] sm:$0xf]
  %v34 = vld [vmem:[%s0 + $0x28] sm:$0xf]
  %v35 = vld [vmem:[%s0 + $0x2c] sm:$0xf]
  %v36 = vld [vmem:[%s0 + $0x30] sm:$0xf]
  %v37 = vld [vmem:[%s0 + $0x34] sm:$0xf]
  %v38 = vld [vmem:[%s0 + $0x38] sm:$0xf]
  %v39 = vld [vmem:[%s0 + $0x3c] sm:$0xf]
  %v40 = vld [vmem:[%s1] sm:$0xf]
  %v41 = vld [vmem:[%s1 + $0x4] sm:$0xf]
  %v42 = vld [vmem:[%s1 + $0x8] sm:$0xf]
  %v43 = vld [vmem:[%s1 + $0xc] sm:$0xf]
  %v44 = vld [vmem:[%s2] sm:$0x1]
  %v46 = vlaneseq
  %v47 = vshrl.u32 %v46, 7
  %v48 = vsub.s32 0, %v47
  %v49 = vrot.slane %v44, %v48
  %v67 = vunpack.c.l.b16 %v24
  %v68 = vunpack.c.l.b16 %v25
  %v69 = vunpack.c.l.b16 %v26
  %v70 = vunpack.c.l.b16 %v27
  %v71 = vunpack.c.l.b16 %v28
  %v72 = vunpack.c.l.b16 %v29
  %v73 = vunpack.c.l.b16 %v30
  %v74 = vunpack.c.l.b16 %v31
  %v75 = vunpack.c.l.b16 %v32
  %v76 = vunpack.c.l.b16 %v33
  %v77 = vunpack.c.l.b16 %v34
  %v78 = vunpack.c.l.b16 %v35
  %v79 = vunpack.c.l.b16 %v36
  %v80 = vunpack.c.l.b16 %v37
  %v81 = vunpack.c.l.b16 %v38
  %v82 = vunpack.c.l.b16 %v39
  %v83 = vpack.c.b16 %v68, %v67
  %v84 = vpack.c.b16 %v70, %v69
  %v85 = vpack.c.b16 %v72, %v71
  %v86 = vpack.c.b16 %v74, %v73
  %v87 = vpack.c.b16 %v76, %v75
  %v88 = vpack.c.b16 %v78, %v77
  %v89 = vpack.c.b16 %v80, %v79
  %v90 = vpack.c.b16 %v82, %v81
  %v95 = vunpack.c.l.b16 %v40
  %v96 = vunpack.c.l.b16 %v41
  %v97 = vunpack.c.l.b16 %v42
  %v98 = vunpack.c.l.b16 %v43
  %v99 = vpack.c.b16 %v96, %v95
  %v100 = vpack.c.b16 %v98, %v97
  %vm103 = vcmask 261120
  %v105 = vsel %vm103, %v83, 0
  %v108 = vsel %vm103, %v84, 0
  %v111 = vsel %vm103, %v85, 0
  %v114 = vsel %vm103, %v86, 0
  %v117 = vsel %vm103, %v87, 0
  %v120 = vsel %vm103, %v88, 0
  %v123 = vsel %vm103, %v89, 0
  %v126 = vsel %vm103, %v90, 0
  %128 = vmatprep.subr.bf16.mxu0 0
  %129 = vmatpush1.bf16.msra.mxu0 %v99
  %130 = vmatprep.subr.bf16.mxu0 0
  %131 = vmatpush1.bf16.msra.mxu0 %v100
  %132 = vmatprep.subr.bf16.mxu0 0
  %133 = vmatpush1.bf16.msra.mxu0 0
  %134 = vmatprep.subr.bf16.mxu0 0
  %135 = vmatpush1.bf16.msra.mxu0 0
  %136 = vmatprep.subr.bf16.mxu0 0
  %137 = vmatpush1.bf16.msra.mxu0 0
  %138 = vmatprep.subr.bf16.mxu0 0
  %139 = vmatpush1.bf16.msra.mxu0 0
  %140 = vmatprep.subr.bf16.mxu0 0
  %141 = vmatpush1.bf16.msra.mxu0 0
  %142 = vmatprep.subr.bf16.mxu0 0
  %143 = vmatpush1.bf16.msra.mxu0 0
  %144 = vmatprep.subr.bf16.mxu0 0
  %145 = vmatpush1.bf16.msra.mxu0 0
  %146 = vmatprep.subr.bf16.mxu0 0
  %147 = vmatpush1.bf16.msra.mxu0 0
  %148 = vmatprep.subr.bf16.mxu0 0
  %149 = vmatpush1.bf16.msra.mxu0 0
  %150 = vmatprep.subr.bf16.mxu0 0
  %151 = vmatpush1.bf16.msra.mxu0 0
  %152 = vmatprep.subr.bf16.mxu0 0
  %153 = vmatpush1.bf16.msra.mxu0 0
  %154 = vmatprep.subr.bf16.mxu0 0
  %155 = vmatpush1.bf16.msra.mxu0 0
  %156 = vmatprep.subr.bf16.mxu0 0
  %157 = vmatpush1.bf16.msra.mxu0 0
  %158 = vmatprep.subr.bf16.mxu0 0
  %159 = vmatpush1.bf16.msra.mxu0 0
  %160 = vmatprep.mubr.bf16.mxu0 0
  %161 = vmatmul.mubr.bf16.gmra.mrb[0].mxu0 %v105
  %v162 = vpop.f32.mrb[0].mxu0
  %v163 = vadd.f32 %v49, %v162
  %v164 = vpop.f32.mrb[0].mxu0
  %v165 = vpop.f32.mrb[0].mxu0
  %v166 = vadd.f32 %v49, %v165
  %v167 = vpop.f32.mrb[0].mxu0
  %168 = vmatprep.mubr.bf16.mxu0 0
  %169 = vmatmul.mubr.bf16.gmra.mrb[0].mxu0 %v108
  %v170 = vpop.f32.mrb[0].mxu0
  %v171 = vadd.f32 %v49, %v170
  %v172 = vpop.f32.mrb[0].mxu0
  %v173 = vpop.f32.mrb[0].mxu0
  %v174 = vadd.f32 %v49, %v173
  %v175 = vpop.f32.mrb[0].mxu0
  %176 = vmatprep.mubr.bf16.mxu0 0
  %177 = vmatmul.mubr.bf16.gmra.mrb[0].mxu0 %v111
  %v178 = vpop.f32.mrb[0].mxu0
  %v179 = vadd.f32 %v49, %v178
  %v180 = vpop.f32.mrb[0].mxu0
  %v181 = vpop.f32.mrb[0].mxu0
  %v182 = vadd.f32 %v49, %v181
  %v183 = vpop.f32.mrb[0].mxu0
  %184 = vmatprep.mubr.bf16.mxu0 0
  %185 = vmatmul.mubr.bf16.gmra.mrb[0].mxu0 %v114
  %v186 = vpop.f32.mrb[0].mxu0
  %v187 = vadd.f32 %v49, %v186
  %v188 = vpop.f32.mrb[0].mxu0
  %v189 = vpop.f32.mrb[0].mxu0
  %v190 = vadd.f32 %v49, %v189
  %v191 = vpop.f32.mrb[0].mxu0
  %192 = vmatprep.mubr.bf16.mxu0 0
  %193 = vmatmul.mubr.bf16.gmra.mrb[0].mxu0 %v117
  %v194 = vpop.f32.mrb[0].mxu0
  %v195 = vadd.f32 %v49, %v194
  %v196 = vpop.f32.mrb[0].mxu0
  %v197 = vpop.f32.mrb[0].mxu0
  %v198 = vadd.f32 %v49, %v197
  %v199 = vpop.f32.mrb[0].mxu0
  %200 = vmatprep.mubr.bf16.mxu0 0
  %201 = vmatmul.mubr.bf16.gmra.mrb[0].mxu0 %v120
  %v202 = vpop.f32.mrb[0].mxu0
  %v203 = vadd.f32 %v49, %v202
  %v204 = vpop.f32.mrb[0].mxu0
  %v205 = vpop.f32.mrb[0].mxu0
  %v206 = vadd.f32 %v49, %v205
  %v207 = vpop.f32.mrb[0].mxu0
  %208 = vmatprep.mubr.bf16.mxu0 0
  %209 = vmatmul.mubr.bf16.gmra.mrb[0].mxu0 %v123
  %v210 = vpop.f32.mrb[0].mxu0
  %v211 = vadd.f32 %v49, %v210
  %v212 = vpop.f32.mrb[0].mxu0
  %v213 = vpop.f32.mrb[0].mxu0
  %v214 = vadd.f32 %v49, %v213
  %v215 = vpop.f32.mrb[0].mxu0
  %216 = vmatprep.mubr.bf16.mxu0 0
  %217 = vmatmul.mubr.bf16.gmra.mrb[0].mxu0 %v126
  %v218 = vpop.f32.mrb[0].mxu0
  %v219 = vadd.f32 %v49, %v218
  %v220 = vpop.f32.mrb[0].mxu0
  %v221 = vpop.f32.mrb[0].mxu0
  %v222 = vadd.f32 %v49, %v221
  %v223 = vpop.f32.mrb[0].mxu0
  %224 = vdwg.mxu0
  %v225 = vmax.f32 %v163, 0.0
  %v226 = vmax.f32 %v166, 0.0
  %v227 = vmax.f32 %v171, 0.0
  %v228 = vmax.f32 %v174, 0.0
  %v229 = vmax.f32 %v179, 0.0
  %v230 = vmax.f32 %v182, 0.0
  %v231 = vmax.f32 %v187, 0.0
  %v232 = vmax.f32 %v190, 0.0
  %v233 = vmax.f32 %v195, 0.0
  %v234 = vmax.f32 %v198, 0.0
  %v235 = vmax.f32 %v203, 0.0
  %v236 = vmax.f32 %v206, 0.0
  %v237 = vmax.f32 %v211, 0.0
  %v238 = vmax.f32 %v214, 0.0
  %v239 = vmax.f32 %v219, 0.0
  %v240 = vmax.f32 %v222, 0.0
  %v241 = vpack.c.bf16 %v226, %v225
  %v242 = vpack.c.bf16 %v228, %v227
  %v243 = vpack.c.bf16 %v230, %v229
  %v244 = vpack.c.bf16 %v232, %v231
  %v245 = vpack.c.bf16 %v234, %v233
  %v246 = vpack.c.bf16 %v236, %v235
  %v247 = vpack.c.bf16 %v238, %v237
  %v248 = vpack.c.bf16 %v240, %v239
  %v249 = vld [vmem:[%s3] sm:$0xf]
  %v250 = vld [vmem:[%s3 + $0x4] sm:$0xf]
  %v251 = vld [vmem:[%s3 + $0x8] sm:$0xf]
  %v252 = vld [vmem:[%s3 + $0xc] sm:$0xf]
  %v253 = vld [vmem:[%s3 + $0x10] sm:$0xf]
  %v254 = vld [vmem:[%s3 + $0x14] sm:$0xf]
  %v255 = vld [vmem:[%s3 + $0x18] sm:$0xf]
  %v256 = vld [vmem:[%s3 + $0x1c] sm:$0xf]
  %v257 = vld [vmem:[%s4] sm:$0x1]
  %v259 = vlaneseq
  %v260 = vshrl.u32 %v259, 7
  %v261 = vsub.s32 0, %v260
  %v262 = vrot.slane %v257, %v261
  %v272 = vunpack.c.l.b16 %v249
  %v273 = vunpack.c.l.b16 %v250
  %v274 = vunpack.c.l.b16 %v251
  %v275 = vunpack.c.l.b16 %v252
  %v276 = vunpack.c.l.b16 %v253
  %v277 = vunpack.c.l.b16 %v254
  %v278 = vunpack.c.l.b16 %v255
  %v279 = vunpack.c.l.b16 %v256
  %v280 = vpack.c.b16 %v273, %v272
  %v281 = vpack.c.b16 %v275, %v274
  %v282 = vpack.c.b16 %v277, %v276
  %v283 = vpack.c.b16 %v279, %v278
  %vm288 = vcmask 523264
  %v290 = vsel %vm288, %v241, 0
  %v293 = vsel %vm288, %v242, 0
  %v296 = vsel %vm288, %v243, 0
  %v299 = vsel %vm288, %v244, 0
  %v302 = vsel %vm288, %v245, 0
  %v305 = vsel %vm288, %v246, 0
  %v308 = vsel %vm288, %v247, 0
  %v311 = vsel %vm288, %v248, 0
  %313 = vmatprep.subr.bf16.mxu0 0
  %314 = vmatpush1.bf16.msra.mxu0 %v280
  %315 = vmatprep.subr.bf16.mxu0 0
  %316 = vmatpush1.bf16.msra.mxu0 %v281
  %317 = vmatprep.subr.bf16.mxu0 0
  %318 = vmatpush1.bf16.msra.mxu0 %v282
  %319 = vmatprep.subr.bf16.mxu0 0
  %320 = vmatpush1.bf16.msra.mxu0 %v283
  %321 = vmatprep.subr.bf16.mxu0 0
  %322 = vmatpush1.bf16.msra.mxu0 0
  %323 = vmatprep.subr.bf16.mxu0 0
  %324 = vmatpush1.bf16.msra.mxu0 0
  %325 = vmatprep.subr.bf16.mxu0 0
  %326 = vmatpush1.bf16.msra.mxu0 0
  %327 = vmatprep.subr.bf16.mxu0 0
  %328 = vmatpush1.bf16.msra.mxu0 0
  %329 = vmatprep.subr.bf16.mxu0 0
  %330 = vmatpush1.bf16.msra.mxu0 0
  %331 = vmatprep.subr.bf16.mxu0 0
  %332 = vmatpush1.bf16.msra.mxu0 0
  %333 = vmatprep.subr.bf16.mxu0 0
  %334 = vmatpush1.bf16.msra.mxu0 0
  %335 = vmatprep.subr.bf16.mxu0 0
  %336 = vmatpush1.bf16.msra.mxu0 0
  %337 = vmatprep.subr.bf16.mxu0 0
  %338 = vmatpush1.bf16.msra.mxu0 0
  %339 = vmatprep.subr.bf16.mxu0 0
  %340 = vmatpush1.bf16.msra.mxu0 0
  %341 = vmatprep.subr.bf16.mxu0 0
  %342 = vmatpush1.bf16.msra.mxu0 0
  %343 = vmatprep.subr.bf16.mxu0 0
  %344 = vmatpush1.bf16.msra.mxu0 0
  %345 = vmatprep.mubr.bf16.mxu0 0
  %346 = vmatmul.mubr.bf16.gmra.mrb[0].mxu0 %v290
  %v347 = vpop.f32.mrb[0].mxu0
  %v348 = vadd.f32 %v262, %v347
  %v349 = vpop.f32.mrb[0].mxu0
  %v350 = vpop.f32.mrb[0].mxu0
  %v351 = vadd.f32 %v262, %v350
  %v352 = vpop.f32.mrb[0].mxu0
  %353 = vmatprep.mubr.bf16.mxu0 0
  %354 = vmatmul.mubr.bf16.gmra.mrb[0].mxu0 %v293
  %v355 = vpop.f32.mrb[0].mxu0
  %v356 = vadd.f32 %v262, %v355
  %v357 = vpop.f32.mrb[0].mxu0
  %v358 = vpop.f32.mrb[0].mxu0
  %v359 = vadd.f32 %v262, %v358
  %v360 = vpop.f32.mrb[0].mxu0
  %361 = vmatprep.mubr.bf16.mxu0 0
  %362 = vmatmul.mubr.bf16.gmra.mrb[0].mxu0 %v296
  %v363 = vpop.f32.mrb[0].mxu0
  %v364 = vadd.f32 %v262, %v363
  %v365 = vpop.f32.mrb[0].mxu0
  %v366 = vpop.f32.mrb[0].mxu0
  %v367 = vadd.f32 %v262, %v366
  %v368 = vpop.f32.mrb[0].mxu0
  %369 = vmatprep.mubr.bf16.mxu0 0
  %370 = vmatmul.mubr.bf16.gmra.mrb[0].mxu0 %v299
  %v371 = vpop.f32.mrb[0].mxu0
  %v372 = vadd.f32 %v262, %v371
  %v373 = vpop.f32.mrb[0].mxu0
  %v374 = vpop.f32.mrb[0].mxu0
  %v375 = vadd.f32 %v262, %v374
  %v376 = vpop.f32.mrb[0].mxu0
  %377 = vmatprep.mubr.bf16.mxu0 0
  %378 = vmatmul.mubr.bf16.gmra.mrb[0].mxu0 %v302
  %v379 = vpop.f32.mrb[0].mxu0
  %v380 = vadd.f32 %v262, %v379
  %v381 = vpop.f32.mrb[0].mxu0
  %v382 = vpop.f32.mrb[0].mxu0
  %v383 = vadd.f32 %v262, %v382
  %v384 = vpop.f32.mrb[0].mxu0
  %385 = vmatprep.mubr.bf16.mxu0 0
  %386 = vmatmul.mubr.bf16.gmra.mrb[0].mxu0 %v305
  %v387 = vpop.f32.mrb[0].mxu0
  %v388 = vadd.f32 %v262, %v387
  %v389 = vpop.f32.mrb[0].mxu0
  %v390 = vpop.f32.mrb[0].mxu0
  %v391 = vadd.f32 %v262, %v390
  %v392 = vpop.f32.mrb[0].mxu0
  %393 = vmatprep.mubr.bf16.mxu0 0
  %394 = vmatmul.mubr.bf16.gmra.mrb[0].mxu0 %v308
  %v395 = vpop.f32.mrb[0].mxu0
  %v396 = vadd.f32 %v262, %v395
  %v397 = vpop.f32.mrb[0].mxu0
  %v398 = vpop.f32.mrb[0].mxu0
  %v399 = vadd.f32 %v262, %v398
  %v400 = vpop.f32.mrb[0].mxu0
  %401 = vmatprep.mubr.bf16.mxu0 0
  %402 = vmatmul.mubr.bf16.gmra.mrb[0].mxu0 %v311
  %v403 = vpop.f32.mrb[0].mxu0
  %v404 = vadd.f32 %v262, %v403
  %v405 = vpop.f32.mrb[0].mxu0
  %v406 = vpop.f32.mrb[0].mxu0
  %v407 = vadd.f32 %v262, %v406
  %v408 = vpop.f32.mrb[0].mxu0
  %409 = vdwg.mxu0
  %v410 = vmax.f32 %v348, 0.0
  %v411 = vmax.f32 %v351, 0.0
  %v412 = vmax.f32 %v356, 0.0
  %v413 = vmax.f32 %v359, 0.0
  %v414 = vmax.f32 %v364, 0.0
  %v415 = vmax.f32 %v367, 0.0
  %v416 = vmax.f32 %v372, 0.0
  %v417 = vmax.f32 %v375, 0.0
  %v418 = vmax.f32 %v380, 0.0
  %v419 = vmax.f32 %v383, 0.0
  %v420 = vmax.f32 %v388, 0.0
  %v421 = vmax.f32 %v391, 0.0
  %v422 = vmax.f32 %v396, 0.0
  %v423 = vmax.f32 %v399, 0.0
  %v424 = vmax.f32 %v404, 0.0
  %v425 = vmax.f32 %v407, 0.0
  %v426 = vld [vmem:[%s5] sm:$0x1]
  %v428 = vlaneseq
  %v429 = vshrl.u32 %v428, 7
  %v430 = vsub.s32 0, %v429
  %v431 = vrot.slane %v426, %v430
  %v433 = vmul.f32 %v410, %v431
  %v434 = vmul.f32 %v411, %v431
  %v435 = vmul.f32 %v412, %v431
  %v436 = vmul.f32 %v413, %v431
  %v437 = vmul.f32 %v414, %v431
  %v438 = vmul.f32 %v415, %v431
  %v439 = vmul.f32 %v416, %v431
  %v440 = vmul.f32 %v417, %v431
  %v441 = vmul.f32 %v418, %v431
  %v442 = vmul.f32 %v419, %v431
  %v443 = vmul.f32 %v420, %v431
  %v444 = vmul.f32 %v421, %v431
  %v445 = vmul.f32 %v422, %v431
  %v446 = vmul.f32 %v423, %v431
  %v447 = vmul.f32 %v424, %v431
  %v448 = vmul.f32 %v425, %v431
  %v449 = vsel %vm103, %v433, 0.0
  %450 = vadd.xlane.f32.xlu0 %v449
  %v451 = vpop.xlane.xlu0 %450
  %v452 = vsel %vm103, %v434, 0.0
  %453 = vadd.xlane.f32.xlu0 %v452
  %v454 = vpop.xlane.xlu0 %453
  %v455 = vsel %vm103, %v435, 0.0
  %456 = vadd.xlane.f32.xlu0 %v455
  %v457 = vpop.xlane.xlu0 %456
  %v458 = vsel %vm103, %v436, 0.0
  %459 = vadd.xlane.f32.xlu0 %v458
  %v460 = vpop.xlane.xlu0 %459
  %v461 = vsel %vm103, %v437, 0.0
  %462 = vadd.xlane.f32.xlu0 %v461
  %v463 = vpop.xlane.xlu0 %462
  %v464 = vsel %vm103, %v438, 0.0
  %465 = vadd.xlane.f32.xlu0 %v464
  %v466 = vpop.xlane.xlu0 %465
  %v467 = vsel %vm103, %v439, 0.0
  %468 = vadd.xlane.f32.xlu0 %v467
  %v469 = vpop.xlane.xlu0 %468
  %v470 = vsel %vm103, %v440, 0.0
  %471 = vadd.xlane.f32.xlu0 %v470
  %v472 = vpop.xlane.xlu0 %471
  %v473 = vsel %vm103, %v441, 0.0
  %474 = vadd.xlane.f32.xlu0 %v473
  %v475 = vpop.xlane.xlu0 %474
  %v476 = vsel %vm103, %v442, 0.0
  %477 = vadd.xlane.f32.xlu0 %v476
  %v478 = vpop.xlane.xlu0 %477
  %v479 = vsel %vm103, %v443, 0.0
  %480 = vadd.xlane.f32.xlu0 %v479
  %v481 = vpop.xlane.xlu0 %480
  %v482 = vsel %vm103, %v444, 0.0
  %483 = vadd.xlane.f32.xlu0 %v482
  %v484 = vpop.xlane.xlu0 %483
  %v485 = vsel %vm103, %v445, 0.0
  %486 = vadd.xlane.f32.xlu0 %v485
  %v487 = vpop.xlane.xlu0 %486
  %v488 = vsel %vm103, %v446, 0.0
  %489 = vadd.xlane.f32.xlu0 %v488
  %v490 = vpop.xlane.xlu0 %489
  %v491 = vsel %vm103, %v447, 0.0
  %492 = vadd.xlane.f32.xlu0 %v491
  %v493 = vpop.xlane.xlu0 %492
  %v494 = vsel %vm103, %v448, 0.0
  %495 = vadd.xlane.f32.xlu0 %v494
  %v496 = vpop.xlane.xlu0 %495
  %vm497 = vcmask 7168
  %498 = vst.msk [vmem:[%s6] sm:$0xff] %vm497, %v451
  %499 = vst.msk [vmem:[%s6 + $0x8] sm:$0xff] %vm497, %v454
  %500 = vst.msk [vmem:[%s6 + $0x10] sm:$0xff] %vm497, %v457
  %501 = vst.msk [vmem:[%s6 + $0x18] sm:$0xff] %vm497, %v460
  %502 = vst.msk [vmem:[%s6 + $0x20] sm:$0xff] %vm497, %v463
  %503 = vst.msk [vmem:[%s6 + $0x28] sm:$0xff] %vm497, %v466
  %504 = vst.msk [vmem:[%s6 + $0x30] sm:$0xff] %vm497, %v469
  %505 = vst.msk [vmem:[%s6 + $0x38] sm:$0xff] %vm497, %v472
  %506 = vst.msk [vmem:[%s6 + $0x40] sm:$0xff] %vm497, %v475
  %507 = vst.msk [vmem:[%s6 + $0x48] sm:$0xff] %vm497, %v478
  %508 = vst.msk [vmem:[%s6 + $0x50] sm:$0xff] %vm497, %v481
  %509 = vst.msk [vmem:[%s6 + $0x58] sm:$0xff] %vm497, %v484
  %510 = vst.msk [vmem:[%s6 + $0x60] sm:$0xff] %vm497, %v487
  %511 = vst.msk [vmem:[%s6 + $0x68] sm:$0xff] %vm497, %v490
  %512 = vst.msk [vmem:[%s6 + $0x70] sm:$0xff] %vm497, %v493
  %513 = vst.msk [vmem:[%s6 + $0x78] sm:$0xff] %vm497, %v496
  // Predicated region
  $region26: #{net_forward.1} parent=0 // pred_check
    _
  $region27: #{net_forward.1} parent=0 // pred_check_branch
    %515 = sbr.rel (0) target = $region29
  $region28: #{net_forward.1} parent=0 // pred_region
    _
  $region29: #{net_forward.1} parent=0 // pred_fallthru
    _
  // Predicated region
  $region30: #{net_forward.1} parent=0 // pred_check
    _
  $region31: #{net_forward.1} parent=0 // pred_check_branch
    %517 = sbr.rel (0) target = $region33
  $region32: #{net_forward.1} parent=0 // pred_region
    _
  $region33: #{net_forward.1} parent=0 // pred_fallthru
    _

</llo_original>
